<compile_context>
chip_gen: v5e
topology: v5e:2x2
jax: 0.10.0
libtpu: 0.0.40
codegen_flags: <defaults>
</compile_context>

<pallas_src>
import functools

import jax
import jax.numpy as jnp
from jax.experimental import pallas as pl
from jax.experimental.pallas import tpu as pltpu


def _round_up(x: int, m: int) -> int:
    return (x + m - 1) // m * m


def _nll_partial_kernel(pred_ref, tgt_ref, out_ref, acc_ref, *, n_rows):
    i = pl.program_id(0)            # N-tile index (parallel)
    j = pl.program_id(1)            # C-tile index (reduction, arbitrary)

    @pl.when(j == 0)
    def _init():
        acc_ref[...] = jnp.zeros_like(acc_ref)

    pred = pred_ref[...]            # (TN, TC) native dtype
    tn, tc = pred.shape

    # Fold row validity and the absolute column offset into the (TN,1) target:
    # padded remainder rows get -1, which can never match a local column in [0, TC).
    tgt = tgt_ref[...]              # (TN, 1) int32
    row = jax.lax.broadcasted_iota(jnp.int32, (tn, 1), 0) + i * tn
    local_tgt = jnp.where(row < n_rows, tgt - j * tc, jnp.int32(-1))

    # One-hot via a single full-tile compare against the local column iota.
    col = jax.lax.broadcasted_iota(jnp.int32, (tn, tc), 1)
    hit = col == local_tgt          # broadcast (TN,1) -> (TN,TC)

    # Select + row-reduce in native dtype (exact: <=1 nonzero per row per tile),
    # cast only the (TN,1) row sums to f32 for accumulation.
    zero = jnp.zeros((), pred.dtype)
    rowsum = jnp.sum(jnp.where(hit, pred, zero), axis=-1, keepdims=True)
    acc_ref[...] += rowsum.astype(jnp.float32)

    @pl.when(j == pl.num_programs(1) - 1)
    def _finalize():
        out_ref[0, 0] = jnp.sum(acc_ref[...])


def nll_loss(pred: jax.Array, target: jax.Array, *, tn: int = 512,
             tc: int = 4096) -> jax.Array:
    """F.nll_loss(pred, target) with reduction='mean' (PyTorch default)."""
    n, c = pred.shape

    # Round tile requests so partial-tile BlockSpecs are always legal
    # (sublane multiple of 16 covers f32 and bf16; lanes multiple of 128).
    tn = max(16, _round_up(tn, 16))
    tc = max(128, _round_up(tc, 128))

    # Full dim when it fits (always legal), otherwise aligned tiles.
    block_n = n if n <= tn else tn
    block_c = c if c <= tc else tc

    # v7x megacore: if the whole N fits one tile but is large, split it so the
    # "parallel" axis has >=2 tiles and both TensorCores get work.
    if block_n == n and n >= 256:
        block_n = _round_up(pl.cdiv(n, 2), 16)

    grid = (pl.cdiv(n, block_n), pl.cdiv(c, block_c))

    tgt2d = target.astype(jnp.int32).reshape(n, 1)

    kernel = functools.partial(_nll_partial_kernel, n_rows=n)

    cost = pl.CostEstimate(
        flops=2 * n * c,
        transcendentals=0,
        bytes_accessed=n * c * pred.dtype.itemsize + 4 * n + 4 * grid[0],
    )

    partials = pl.pallas_call(
        kernel,
        out_shape=jax.ShapeDtypeStruct((grid[0], 1), jnp.float32),
        grid=grid,
        in_specs=[
            # pred streamed in native dtype, lane-dense on the class axis.
            pl.BlockSpec((block_n, block_c), lambda i, j: (i, j)),
            # target rides along the N axis only.
            pl.BlockSpec((block_n, 1), lambda i, j: (i, 0)),
        ],
        # One f32 partial sum per N tile (SMEM scalar block): N stays parallel,
        # C is the only 'arbitrary' (reduction) axis.
        out_specs=pl.BlockSpec((1, 1), lambda i, j: (i, 0),
                               memory_space=pltpu.SMEM),
        # f32 vector accumulator: elementwise add every C step, one reduce at the end.
        scratch_shapes=[pltpu.VMEM((block_n, 1), jnp.float32)],
        compiler_params=pltpu.CompilerParams(
            dimension_semantics=("parallel", "arbitrary"),
            vmem_limit_bytes=48 * 1024 * 1024,
        ),
        cost_estimate=cost,
    )(pred, tgt2d)

    # Finish the mean (negate + divide by the true N) in JAX.
    return -jnp.sum(partials) / jnp.float32(n)


if __name__ == "__main__":
    key = jax.random.PRNGKey(0)
    k1, k2, k3, k4 = jax.random.split(key, 4)

    # --- Test 1: small shapes consistent with a classification head (single tile). ---
    N, C = 8, 16
    logits = jax.random.normal(k1, (N, C), dtype=jnp.float32)
    pred = jax.nn.log_softmax(logits, axis=-1)           # log-probs, as nll_loss expects
    target = jax.random.randint(k2, (N,), 0, C, dtype=jnp.int32)

    loss = nll_loss(pred, target)
    jax.block_until_ready(loss)

    ref = -jnp.mean(pred[jnp.arange(N), target])
    assert jnp.allclose(loss, ref, atol=1e-6, rtol=1e-6), (loss, ref)

    # --- Test 2: multi-tile grid with N/C remainders and native bf16 input. ---
    N2, C2 = 37, 300
    logits2 = jax.random.normal(k3, (N2, C2), dtype=jnp.float32)
    pred2 = jax.nn.log_softmax(logits2, axis=-1).astype(jnp.bfloat16)
    target2 = jax.random.randint(k4, (N2,), 0, C2, dtype=jnp.int32)

    loss2 = nll_loss(pred2, target2, tn=16, tc=128)      # forces 3x3 grid + masking
    jax.block_until_ready(loss2)

    ref2 = -jnp.mean(pred2.astype(jnp.float32)[jnp.arange(N2), target2])
    assert jnp.allclose(loss2, ref2, atol=2e-2, rtol=2e-2), (loss2, ref2)

    print("KERNEL_OK")
</pallas_src>

<mosaic_0001>
module attributes {stable_mosaic.version = 11 : i64} {
  func.func @_nll_partial_kernel(%arg0: i32, %arg1: i32, %arg2: memref<8x16xf32, #tpu.memory_space<vmem>>, %arg3: memref<8x1xi32, #tpu.memory_space<vmem>>, %arg4: memref<1x1xf32, #tpu.memory_space<smem>>, %arg5: memref<8x1xf32, #tpu.memory_space<vmem>>) attributes {dimension_semantics = [#tpu.dimension_semantics<parallel>, #tpu.dimension_semantics<arbitrary>], iteration_bounds = array<i64: 1, 1>, scalar_prefetch = 0 : i64, scratch_operands = 1 : i64, tpu.core_type = #tpu.core_type<tc>, window_params = [{transform_indices = @transform_0, window_bounds = array<i64: 8, 16>}, {transform_indices = @transform_1, window_bounds = array<i64: 8, 1>}, {transform_indices = @transform_2, window_bounds = array<i64: 1, 1>}]} {
    %c0_i32 = arith.constant 0 : i32
    %0 = arith.cmpi eq, %arg1, %c0_i32 : i32
    %1 = arith.extui %0 : i1 to i32
    %c0_i32_0 = arith.constant 0 : i32
    %2 = arith.cmpi ne, %1, %c0_i32_0 : i32
    scf.if %2 {
      %cst_12 = arith.constant 0.000000e+00 : f32
      %29 = vector.broadcast %cst_12 : f32 to vector<8x1xf32>
      %c0_13 = arith.constant 0 : index
      %c0_14 = arith.constant 0 : index
      %30 = vector.load %arg5[%c0_13, %c0_14] : memref<8x1xf32, #tpu.memory_space<vmem>>, vector<8x1xf32>
      tpu.vector_store %arg5[%c0_13, %c0_14], %29 {strides = array<i32>} : memref<8x1xf32, #tpu.memory_space<vmem>>, vector<8x1xf32>,
    } else {
    }
    %c0 = arith.constant 0 : index
    %c0_1 = arith.constant 0 : index
    %3 = vector.load %arg2[%c0, %c0_1] : memref<8x16xf32, #tpu.memory_space<vmem>>, vector<8x16xf32>
    %c0_2 = arith.constant 0 : index
    %c0_3 = arith.constant 0 : index
    %4 = vector.load %arg3[%c0_2, %c0_3] : memref<8x1xi32, #tpu.memory_space<vmem>>, vector<8x1xi32>
    %5 = tpu.iota {dimensions = array<i32: 0>} : vector<8x1xi32>
    %c8_i32 = arith.constant 8 : i32
    %6 = arith.muli %arg0, %c8_i32 : i32
    %7 = vector.broadcast %6 : i32 to vector<8x1xi32>
    %8 = arith.addi %5, %7 : vector<8x1xi32>
    %c8_i32_4 = arith.constant 8 : i32
    %9 = vector.broadcast %c8_i32_4 : i32 to vector<8x1xi32>
    %10 = arith.cmpi slt, %8, %9 : vector<8x1xi32>
    %c16_i32 = arith.constant 16 : i32
    %11 = arith.muli %arg1, %c16_i32 : i32
    %12 = vector.broadcast %11 : i32 to vector<8x1xi32>
    %13 = arith.subi %4, %12 : vector<8x1xi32>
    %c-1_i32 = arith.constant -1 : i32
    %14 = vector.broadcast %c-1_i32 : i32 to vector<8x1xi32>
    %15 = arith.select %10, %13, %14 : vector<8x1xi1>, vector<8x1xi32>
    %16 = tpu.iota {dimensions = array<i32: 1>} : vector<8x16xi32>
    %17 = vector.broadcast %15 : vector<8x1xi32> to vector<8x16xi32>
    %18 = arith.cmpi eq, %16, %17 : vector<8x16xi32>
    %cst = arith.constant 0.000000e+00 : f32
    %19 = vector.broadcast %cst : f32 to vector<8x16xf32>
    %20 = arith.select %18, %3, %19 : vector<8x16xi1>, vector<8x16xf32>
    %cst_5 = arith.constant dense<0.000000e+00> : vector<8xf32>
    %21 = vector.multi_reduction <add>, %20, %cst_5 [1] : vector<8x16xf32> to vector<8xf32>
    %22 = vector.shape_cast %21 : vector<8xf32> to vector<8x1xf32>
    %c0_6 = arith.constant 0 : index
    %c0_7 = arith.constant 0 : index
    %23 = vector.load %arg5[%c0_6, %c0_7] : memref<8x1xf32, #tpu.memory_space<vmem>>, vector<8x1xf32>
    %24 = arith.addf %23, %22 : vector<8x1xf32>
    %c0_8 = arith.constant 0 : index
    %c0_9 = arith.constant 0 : index
    %25 = vector.load %arg5[%c0_8, %c0_9] : memref<8x1xf32, #tpu.memory_space<vmem>>, vector<8x1xf32>
    tpu.vector_store %arg5[%c0_8, %c0_9], %24 {strides = array<i32>} : memref<8x1xf32, #tpu.memory_space<vmem>>, vector<8x1xf32>,
    %c0_i32_10 = arith.constant 0 : i32
    %26 = arith.cmpi eq, %arg1, %c0_i32_10 : i32
    %27 = arith.extui %26 : i1 to i32
    %c0_i32_11 = arith.constant 0 : i32
    %28 = arith.cmpi ne, %27, %c0_i32_11 : i32
    scf.if %28 {
      %c0_12 = arith.constant 0 : index
      %c0_13 = arith.constant 0 : index
      %29 = vector.load %arg5[%c0_12, %c0_13] : memref<8x1xf32, #tpu.memory_space<vmem>>, vector<8x1xf32>
      %30 = vector.shape_cast %29 : vector<8x1xf32> to vector<1x8x1xf32>
      %cst_14 = arith.constant dense<0.000000e+00> : vector<1xf32>
      %31 = vector.multi_reduction <add>, %30, %cst_14 [1, 2] : vector<1x8x1xf32> to vector<1xf32>
      %32 = vector.shape_cast %31 : vector<1xf32> to vector<1x1x1xf32>
      %33 = vector.extract %32[0, 0, 0] : f32 from vector<1x1x1xf32>
      %c0_15 = arith.constant 0 : index
      %c0_16 = arith.constant 0 : index
      %34 = memref.load %arg4[%c0_15, %c0_16] : memref<1x1xf32, #tpu.memory_space<smem>>
      memref.store %33, %arg4[%c0_15, %c0_16] : memref<1x1xf32, #tpu.memory_space<smem>>
    } else {
    }
    return
  }
  func.func @transform_0(%arg0: i32, %arg1: i32) -> (i32, i32) {
    %c0_i32 = arith.constant 0 : i32
    return %arg0, %arg1 : i32, i32
  }
  func.func @transform_1(%arg0: i32, %arg1: i32) -> (i32, i32) {
    %c0_i32 = arith.constant 0 : i32
    %c0_i32_0 = arith.constant 0 : i32
    return %arg0, %c0_i32 : i32, i32
  }
  func.func @transform_2(%arg0: i32, %arg1: i32) -> (i32, i32) {
    %c0_i32 = arith.constant 0 : i32
    %c0_i32_0 = arith.constant 0 : i32
    return %arg0, %c0_i32 : i32, i32
  }
}

</mosaic_0001>

<llo_original>
// kernel: tpu_custom_call.1
$region0: #{tpu_custom_call.1}
  #allocation0 [shape = 'u32[]', space=smem, size = 0x4, offset = 0x4, fixed_abs, tag = 'smem constant byte address 0x4 - core index']
  #allocation1 [shape = 'u32[72,128]{1,0:T(1,128)}', space=vmem, size = 0x9000, scoped, tag = 'internal scratch']
  #allocation2 [shape = 'f32[8,1]{1,0:T(8,128)}', space=vmem, size = 0x1000, scoped, tag = 'scratch operand']
  %s0 = inlined_call_operand.vmem [shape: f32[8,16], index: 0, kind: input, shape index: {}]
  %s1 = inlined_call_operand.vmem [shape: s32[8,1], index: 1, kind: input, shape index: {}]
  %s2 = inlined_call_operand.hbm [shape: f32[1,1], index: 2, kind: output, shape index: {}]
  %s3 = sld [smem:[#allocation0]]
  $region26: #{tpu_custom_call.1} parent=0
    _
  %s5 = ssub.s32 1, %s3
  %s6 = scalar_select 0, %s5, %s3
  $region1: #{tpu_custom_call.1} parent=0
    #allocation3 [shape = 'u8[512]{0}', space=smem, size = 0x200, scoped, tag = 'output window, operand 0, single buffered']
    #allocation4 [shape = 's32[1]{0}', space=sflag, size = 0x4, scoped, tag = 'scoped memory for tpu_custom_call.1']
    %7 = vsyncpa [#allocation4], 0
    // Predicated region
    $region2: #{tpu_custom_call.1} parent=1 // pred_check
      _
    $region3: #{tpu_custom_call.1} parent=1 // pred_check_branch
      %9 = sbr.rel (0) target = $region5
    $region4: #{tpu_custom_call.1} parent=1 // pred_region
      _
    $region5: #{tpu_custom_call.1} parent=1 // pred_fallthru
      _
    // Predicated region
    $region6: #{tpu_custom_call.1} parent=1 // pred_check
      _
    $region7: #{tpu_custom_call.1} parent=1 // pred_check_branch
      %11 = sbr.rel (0) target = $region9
    $region8: #{tpu_custom_call.1} parent=1 // pred_region
      _
    $region9: #{tpu_custom_call.1} parent=1 // pred_fallthru
      _
    %p12 = scmp.eq.s32.totalorder 0, 0
    // Predicated region
    $region10: #{tpu_custom_call.1} parent=1 // pred_check
      %p13 = pneg %p12
    $region11: #{tpu_custom_call.1} parent=1 // pred_check_branch
      %15 = sbr.rel (%p13) target = $region13
    $region12: #{tpu_custom_call.1} parent=1 // pred_region
      %vm16 = vcmask 7168
      %17 = vst.msk [vmem:[#allocation2] sm:$0xff] %vm16, 0.0
    $region13: #{tpu_custom_call.1} parent=1 // pred_fallthru
      _
    %v18 = vld [vmem:[%s0] sm:$0xff]
    %v19 = vld [vmem:[%s1] sm:$0xff]
    %v20 = vlaneseq
    %v21 = vshrl.u32 %v20, 7
    %s22 = smul.u32 0, 8
    %v23 = vstv %s22
    %v24 = vadd.s32 %v21, %v23
    %vm25 = vcmp.lt.s32.totalorder %v24, 8
    %s26 = smul.u32 0, 16
    %v27 = vstv %s26
    %v28 = vsub.s32 %v19, %v27
    %v29 = vsel %vm25, %v28, 4294967295
    %v30 = vlaneseq
    %v31 = vand.u32 %v30, 127
    %32 = vset.pattern.permute.xlu0 0
    %33 = vperm.xlu0 %32, %v29
    %v34 = vpop.permute.xlu0 %33
    %vm35 = vcmp.eq.s32.totalorder %v31, %v34
    %v36 = vsel %vm35, %v18, 0.0
    %vm37 = vcmask 130048
    %v38 = vsel %vm37, %v36, 0.0
    %39 = vadd.xlane.f32.xlu0 %v38
    %v40 = vpop.xlane.xlu0 %39
    %v41 = vld [vmem:[#allocation2] sm:$0xff]
    %v42 = vadd.f32 %v41, %v40
    %vm43 = vcmask 7168
    %44 = vst.msk [vmem:[#allocation2] sm:$0xff] %vm43, %v42
    // Predicated region
    $region14: #{tpu_custom_call.1} parent=1 // pred_check
      %p45 = pneg %p12
    $region15: #{tpu_custom_call.1} parent=1 // pred_check_branch
      %47 = sbr.rel (%p45) target = $region17
    $region16: #{tpu_custom_call.1} parent=1 // pred_region
      %v48 = vld [vmem:[#allocation2] sm:$0xff]
      %v49 = vsel %vm43, %v48, 0.0
      %50 = vadd.xlane.f32.xlu0 %v49
      %v51 = vpop.xlane.xlu0 %50
      %v52 = vrot.slane %v51, 4
      %v53 = vadd.f32 %v51, %v52
      %v54 = vrot.slane %v53, 2
      %v55 = vadd.f32 %v53, %v54
      %v56 = vrot.slane %v55, 1
      %v57 = vadd.f32 %v55, %v56
      %s58 = vtos %v57
      %s59 = scalar_lea.smem [#allocation3], 0
      %60 = sst [smem:[%s59]] %s58
    $region17: #{tpu_custom_call.1} parent=1 // pred_fallthru
      _
    // Predicated region
    $region18: #{tpu_custom_call.1} parent=1 // pred_check
      _
    $region19: #{tpu_custom_call.1} parent=1 // pred_check_branch
      %62 = sbr.rel (0) target = $region21
    $region20: #{tpu_custom_call.1} parent=1 // pred_region
      %64 = vsyncadd [#allocation4], 0
      %s66 = sshll.u32 %s2, 4
      %s67 = int_to_ptr.hbm [resolvable:$true] %s66
      %69 = dma.smem_to_hbm [#allocation3], 16, %s67, [#allocation4]
    $region21: #{tpu_custom_call.1} parent=1 // pred_fallthru
      _
    // Predicated region
    $region22: #{tpu_custom_call.1} parent=1 // pred_check
      _
    $region23: #{tpu_custom_call.1} parent=1 // pred_check_branch
      %71 = sbr.rel (0) target = $region25
    $region24: #{tpu_custom_call.1} parent=1 // pred_region
      %73 = dma.done [#allocation4], 16
    $region25: #{tpu_custom_call.1} parent=1 // pred_fallthru
      _
    %74 = sfence
    %75 = vsyncpa [#allocation4], 1

</llo_original>
